<compile_context>
chip_gen: v7x
topology: tpu7x:2x2x1
jax: 0.10.0
libtpu: 0.0.40
codegen_flags: <defaults>
</compile_context>

<pallas_src>
import math

import jax
import jax.numpy as jnp
from jax.experimental import pallas as pl
from jax.experimental.pallas import tpu as pltpu


_LANE = 128
_SUBLANE = 8


def _round_up(x, m):
    return (x + m - 1) // m * m


def _round_down(x, m):
    return max(m, x // m * m)


def _vmem_budget():
    """Per-generation (block_bytes, vmem_limit_bytes) for the streaming product.

    v5e / v6e: 128 MiB physical VMEM -> 6 MiB per-array blocks, 80 MiB scoped
    limit.  v7x: only 64 MiB physical -> 4 MiB blocks, 44 MiB limit.  Either
    way the 3 streamed arrays x 2 buffers stay well inside the limit.
    """
    cap = 64 << 20
    try:
        cap = int(getattr(pltpu.get_tpu_info(), "vmem_capacity_bytes", cap)) or cap
    except Exception:  # interpret mode / non-TPU tracing
        pass
    if cap >= (100 << 20):          # v5e / v6e
        return 6 << 20, 80 << 20
    return 4 << 20, 44 << 20        # v7x


def mmtm_gate_kernel(sq_ref, wsq_ref, bsq_ref, wv_ref, bv_ref, ws_ref, bs_ref,
                     g_ref):
    """Tiny FC chain: fc_squeeze -> ReLU -> fc_{visual,skeleton} -> sigmoid.

    Emits the pre-combined f32 gate g = vis_gate * sk_gate (shape (B, C)), so
    the hot streaming pass only does the broadcast multiplies per element.
    """
    sq = sq_ref[...].astype(jnp.float32)                       # (B, Cv+Cs)
    exc = jnp.dot(sq, wsq_ref[...],
                  preferred_element_type=jnp.float32) + bsq_ref[...]
    exc = jnp.maximum(exc, 0.0)                                # ReLU
    vis_gate = jax.nn.sigmoid(
        jnp.dot(exc, wv_ref[...], preferred_element_type=jnp.float32)
        + bv_ref[...])                                         # (B, Cv)
    sk_gate = jax.nn.sigmoid(
        jnp.dot(exc, ws_ref[...], preferred_element_type=jnp.float32)
        + bs_ref[...])                                         # (B, Cs)
    g_ref[...] = vis_gate * sk_gate


def mmtm_product_kernel(v_ref, s_ref, g_ref, o_ref):
    """Streaming gated product on one (BR, BC) tile.

    g_ref is (BR, 1) f32: one combined gate per folded B*C row, broadcast
    across the lane (spatial) dimension.  Math in f32 (VPU slots are idle in
    this HBM-bound kernel); cast only on the final store.
    """
    prod = (v_ref[...].astype(jnp.float32) * s_ref[...].astype(jnp.float32)
            * g_ref[...])
    o_ref[...] = prod.astype(o_ref.dtype)


def mmtm_forward(visual, skeleton, params):
    """visual, skeleton: NCHW arrays of identical shape (as the fused
    visual*vis_out*skeleton*sk_out product in the reference forward requires).

    Output dtype follows the activations' dtype (bf16 in -> bf16 out)."""
    assert visual.shape == skeleton.shape, (
        "fused MMTM product requires matching NCHW shapes")
    B, Cv, H, W = visual.shape
    Cs = skeleton.shape[1]
    # Pre-combined gate g = vis_gate * sk_gate needs Cv == Cs; guaranteed by
    # the shape assert above, made explicit here.
    assert Cv == Cs
    hw = H * W
    dtype = visual.dtype
    itemsize = jnp.dtype(dtype).itemsize

    wsq, bsq, wv, bv, ws, bs = params
    dim = Cv + Cs
    dim_out = wsq.shape[0]
    # torch Linear computes y = x @ W.T + b -> pre-transpose weights in glue.
    wsq_t = wsq.T                                  # (Cv+Cs, dim_out)
    wv_t = wv.T                                    # (dim_out, Cv)
    ws_t = ws.T                                    # (dim_out, Cs)

    # ---- squeeze: channel means over spatial dims (plain XLA streaming
    # reduction; f32 accumulation folded into the reduce). ----
    mean_v = jnp.mean(visual.reshape(B, Cv, hw), axis=-1, dtype=jnp.float32)
    mean_s = jnp.mean(skeleton.reshape(B, Cs, hw), axis=-1, dtype=jnp.float32)
    squeeze = jnp.concatenate([mean_v, mean_s], axis=1)        # (B, Cv+Cs)

    # ---- tiny gate kernel (one-shot, everything resident in VMEM). ----
    vmem = pl.BlockSpec(memory_space=pltpu.MemorySpace.VMEM)
    gate_cost = pl.CostEstimate(
        flops=2 * B * (dim * dim_out + dim_out * Cv + dim_out * Cs),
        transcendentals=B * (Cv + Cs),
        bytes_accessed=4 * (B * dim + dim * dim_out + dim_out
                            + dim_out * Cv + Cv + dim_out * Cs + Cs + B * Cv),
    )
    gate = pl.pallas_call(
        mmtm_gate_kernel,
        out_shape=jax.ShapeDtypeStruct((B, Cv), jnp.float32),
        in_specs=[vmem] * 7,
        out_specs=vmem,
        cost_estimate=gate_cost,
    )(squeeze, wsq_t, bsq.reshape(1, -1), wv_t, bv.reshape(1, -1),
      ws_t, bs.reshape(1, -1))

    # ---- streaming gated product: lane-dense folded (B*C, H*W) layout, no
    # padding (cdiv grid + masked edge blocks). ----
    rows = B * Cv
    cols = hw
    v2 = visual.reshape(rows, cols)
    s2 = skeleton.reshape(rows, cols)
    g2 = gate.reshape(rows, 1)                     # stays f32

    # dtype-aware sublane granularity: 8 rows f32, 16 bf16, 32 int8/fp8.
    sub_gran = _SUBLANE * max(1, 4 // itemsize)
    block_bytes, vmem_limit = _vmem_budget()

    # Lane dimension first: as wide as the budget allows (unmasked,
    # lane-dense stores), then spend the remaining budget on rows.
    cols_pad = _round_up(cols, _LANE)
    bc = min(cols_pad, _round_down(block_bytes // (sub_gran * itemsize), _LANE))
    br = min(_round_up(rows, sub_gran),
             _round_down(block_bytes // (bc * itemsize), sub_gran))

    # v7x megacore: guarantee >= 2 programs along the 'parallel' axes whenever
    # the problem can be split at all (prefer splitting rows to keep lanes wide).
    while pl.cdiv(rows, br) * pl.cdiv(cols, bc) < 2:
        if br > sub_gran:
            br = _round_up(br // 2, sub_gran)
        elif bc > _LANE:
            bc = _round_up(bc // 2, _LANE)
        else:
            break

    prod_cost = pl.CostEstimate(
        flops=3 * rows * cols,
        transcendentals=0,
        bytes_accessed=2 * rows * cols * itemsize   # v2 + s2 reads
                       + rows * 4                   # gate read (f32)
                       + rows * cols * itemsize,    # output write
    )

    out2 = pl.pallas_call(
        mmtm_product_kernel,
        out_shape=jax.ShapeDtypeStruct((rows, cols), dtype),
        grid=(pl.cdiv(rows, br), pl.cdiv(cols, bc)),
        in_specs=[pl.BlockSpec((br, bc), lambda i, j: (i, j)),
                  pl.BlockSpec((br, bc), lambda i, j: (i, j)),
                  pl.BlockSpec((br, 1), lambda i, j: (i, 0))],
        out_specs=pl.BlockSpec((br, bc), lambda i, j: (i, j)),
        compiler_params=pltpu.CompilerParams(
            dimension_semantics=("parallel", "parallel"),
            vmem_limit_bytes=vmem_limit),
        cost_estimate=prod_cost,
    )(v2, s2, g2)

    return out2.reshape(B, Cv, H, W)


def init_mmtm_params(key, dim_visual, dim_skeleton, ratio):
    """Deterministic PyTorch-Linear-style init (uniform +-1/sqrt(fan_in))."""
    dim = dim_visual + dim_skeleton
    dim_out = int(2 * dim / ratio)

    def linear(key, fan_in, fan_out):
        kw, kb = jax.random.split(key)
        bound = 1.0 / math.sqrt(fan_in)
        w = jax.random.uniform(kw, (fan_out, fan_in), jnp.float32, -bound, bound)
        b = jax.random.uniform(kb, (fan_out,), jnp.float32, -bound, bound)
        return w, b

    k1, k2, k3 = jax.random.split(key, 3)
    wsq, bsq = linear(k1, dim, dim_out)
    wv, bv = linear(k2, dim_out, dim_visual)
    ws, bs = linear(k3, dim_out, dim_skeleton)
    return (wsq, bsq, wv, bv, ws, bs)


def mmtm_reference(visual, skeleton, params):
    """Plain-JAX reference matching the PyTorch forward exactly."""
    wsq, bsq, wv, bv, ws, bs = params
    mv = jnp.mean(visual.reshape(visual.shape[:2] + (-1,)), axis=-1)
    ms = jnp.mean(skeleton.reshape(skeleton.shape[:2] + (-1,)), axis=-1)
    squeeze = jnp.concatenate([mv, ms], axis=1)
    exc = jax.nn.relu(squeeze @ wsq.T + bsq)
    vis_out = jax.nn.sigmoid(exc @ wv.T + bv)[:, :, None, None]
    sk_out = jax.nn.sigmoid(exc @ ws.T + bs)[:, :, None, None]
    return visual * vis_out * skeleton * sk_out


if __name__ == "__main__":
    def _check(B, c, H, W, ratio, seed):
        key = jax.random.PRNGKey(seed)
        k_v, k_s, k_p = jax.random.split(key, 3)
        visual = jax.random.normal(k_v, (B, c, H, W), jnp.float32)
        skeleton = jax.random.normal(k_s, (B, c, H, W), jnp.float32)
        params = init_mmtm_params(k_p, c, c, ratio)

        out = jax.block_until_ready(mmtm_forward(visual, skeleton, params))
        ref = mmtm_reference(visual, skeleton, params)
        assert out.shape == ref.shape
        assert jnp.allclose(out, ref, atol=1e-5, rtol=1e-5), "mismatch vs reference"

    _check(2, 4, 16, 16, ratio=2, seed=0)   # aligned: 8 rows x 256 lanes
    _check(3, 6, 7, 7, ratio=4, seed=1)     # unaligned: exercises masked edge blocks
    print("KERNEL_OK")
</pallas_src>

<mosaic_0001>
module attributes {stable_mosaic.version = 11 : i64} {
  func.func @mmtm_gate_kernel(%arg0: memref<2x8xf32, #tpu.memory_space<vmem>>, %arg1: memref<8x8xf32, #tpu.memory_space<vmem>>, %arg2: memref<1x8xf32, #tpu.memory_space<vmem>>, %arg3: memref<8x4xf32, #tpu.memory_space<vmem>>, %arg4: memref<1x4xf32, #tpu.memory_space<vmem>>, %arg5: memref<8x4xf32, #tpu.memory_space<vmem>>, %arg6: memref<1x4xf32, #tpu.memory_space<vmem>>, %arg7: memref<2x4xf32, #tpu.memory_space<vmem>>) attributes {dimension_semantics = [], scalar_prefetch = 0 : i64, scratch_operands = 0 : i64, tpu.core_type = #tpu.core_type<tc>} {
    %c0 = arith.constant 0 : index
    %c0_0 = arith.constant 0 : index
    %0 = vector.load %arg0[%c0, %c0_0] : memref<2x8xf32, #tpu.memory_space<vmem>>, vector<2x8xf32>
    %c0_1 = arith.constant 0 : index
    %c0_2 = arith.constant 0 : index
    %1 = vector.load %arg1[%c0_1, %c0_2] : memref<8x8xf32, #tpu.memory_space<vmem>>, vector<8x8xf32>
    %cst = arith.constant dense<0.000000e+00> : vector<2x8xf32>
    %2 = tpu.matmul %0, %1, %cst {dimension_numbers = #tpu.dot_dimension_numbers<[1], [0], [0], [1], [0, 0, 1, 1], [], []>} : vector<2x8xf32>, vector<8x8xf32>, vector<2x8xf32> -> vector<2x8xf32>
    %c0_3 = arith.constant 0 : index
    %c0_4 = arith.constant 0 : index
    %3 = vector.load %arg2[%c0_3, %c0_4] : memref<1x8xf32, #tpu.memory_space<vmem>>, vector<1x8xf32>
    %4 = vector.broadcast %3 : vector<1x8xf32> to vector<2x8xf32>
    %5 = arith.addf %2, %4 : vector<2x8xf32>
    %cst_5 = arith.constant 0.000000e+00 : f32
    %6 = vector.broadcast %cst_5 : f32 to vector<2x8xf32>
    %7 = arith.maximumf %5, %6 : vector<2x8xf32>
    %c0_6 = arith.constant 0 : index
    %c0_7 = arith.constant 0 : index
    %8 = vector.load %arg3[%c0_6, %c0_7] : memref<8x4xf32, #tpu.memory_space<vmem>>, vector<8x4xf32>
    %cst_8 = arith.constant dense<0.000000e+00> : vector<2x4xf32>
    %9 = tpu.matmul %7, %8, %cst_8 {dimension_numbers = #tpu.dot_dimension_numbers<[1], [0], [0], [1], [0, 0, 1, 1], [], []>} : vector<2x8xf32>, vector<8x4xf32>, vector<2x4xf32> -> vector<2x4xf32>
    %c0_9 = arith.constant 0 : index
    %c0_10 = arith.constant 0 : index
    %10 = vector.load %arg4[%c0_9, %c0_10] : memref<1x4xf32, #tpu.memory_space<vmem>>, vector<1x4xf32>
    %11 = vector.broadcast %10 : vector<1x4xf32> to vector<2x4xf32>
    %12 = arith.addf %9, %11 : vector<2x4xf32>
    %13 = arith.negf %12 : vector<2x4xf32>
    %14 = math.exp %13 : vector<2x4xf32>
    %cst_11 = arith.constant 1.000000e+00 : f32
    %15 = vector.broadcast %cst_11 : f32 to vector<2x4xf32>
    %16 = arith.addf %15, %14 : vector<2x4xf32>
    %17 = arith.divf %15, %16 : vector<2x4xf32>
    %c0_12 = arith.constant 0 : index
    %c0_13 = arith.constant 0 : index
    %18 = vector.load %arg5[%c0_12, %c0_13] : memref<8x4xf32, #tpu.memory_space<vmem>>, vector<8x4xf32>
    %cst_14 = arith.constant dense<0.000000e+00> : vector<2x4xf32>
    %19 = tpu.matmul %7, %18, %cst_14 {dimension_numbers = #tpu.dot_dimension_numbers<[1], [0], [0], [1], [0, 0, 1, 1], [], []>} : vector<2x8xf32>, vector<8x4xf32>, vector<2x4xf32> -> vector<2x4xf32>
    %c0_15 = arith.constant 0 : index
    %c0_16 = arith.constant 0 : index
    %20 = vector.load %arg6[%c0_15, %c0_16] : memref<1x4xf32, #tpu.memory_space<vmem>>, vector<1x4xf32>
    %21 = vector.broadcast %20 : vector<1x4xf32> to vector<2x4xf32>
    %22 = arith.addf %19, %21 : vector<2x4xf32>
    %23 = arith.negf %22 : vector<2x4xf32>
    %24 = math.exp %23 : vector<2x4xf32>
    %cst_17 = arith.constant 1.000000e+00 : f32
    %25 = vector.broadcast %cst_17 : f32 to vector<2x4xf32>
    %26 = arith.addf %25, %24 : vector<2x4xf32>
    %27 = arith.divf %25, %26 : vector<2x4xf32>
    %28 = arith.mulf %17, %27 : vector<2x4xf32>
    %c0_18 = arith.constant 0 : index
    %c0_19 = arith.constant 0 : index
    %29 = vector.load %arg7[%c0_18, %c0_19] : memref<2x4xf32, #tpu.memory_space<vmem>>, vector<2x4xf32>
    tpu.vector_store %arg7[%c0_18, %c0_19], %28 {strides = array<i32>} : memref<2x4xf32, #tpu.memory_space<vmem>>, vector<2x4xf32>,
    return
  }
}

</mosaic_0001>

<llo_original>
// kernel: tpu_custom_call.1
$region0: #{tpu_custom_call.1}
  #allocation0 [shape = 'u32[]', space=smem, size = 0x4, offset = 0x4, fixed_abs, tag = 'smem constant byte address 0x4 - core index']
  #allocation1 [shape = 'u32[144,128]{1,0:T(1,128)}', space=vmem, size = 0x12000, scoped, tag = 'internal scratch']
  %s0 = inlined_call_operand.vmem [shape: f32[2,8], index: 0, kind: input, shape index: {}]
  %s1 = inlined_call_operand.vmem [shape: f32[8,8], index: 1, kind: input, shape index: {}]
  %s2 = inlined_call_operand.vmem [shape: f32[1,8], index: 2, kind: input, shape index: {}]
  %s3 = inlined_call_operand.vmem [shape: f32[8,4], index: 3, kind: input, shape index: {}]
  %s4 = inlined_call_operand.vmem [shape: f32[1,4], index: 4, kind: input, shape index: {}]
  %s5 = inlined_call_operand.vmem [shape: f32[8,4], index: 5, kind: input, shape index: {}]
  %s6 = inlined_call_operand.vmem [shape: f32[1,4], index: 6, kind: input, shape index: {}]
  %s7 = inlined_call_operand.hbm [shape: f32[2,4], index: 7, kind: output, shape index: {}]
  %s8 = sld [smem:[#allocation0]]
  $region38: #{tpu_custom_call.1} parent=0
    _
  %s10 = ssub.s32 1, %s8
  %s11 = scalar_select 0, %s10, %s8
  $region1: #{tpu_custom_call.1} parent=0
    #allocation2 [shape = 'u8[1024]{0}', space=vmem, size = 0x400, scoped, tag = 'output window, operand 0, single buffered']
    #allocation3 [shape = 's32[1]{0}', space=sflag, size = 0x4, scoped, tag = 'scoped memory for tpu_custom_call.1']
    %12 = vsyncpa [#allocation3], 0
    // Predicated region
    $region2: #{tpu_custom_call.1} parent=1 // pred_check
      _
    $region3: #{tpu_custom_call.1} parent=1 // pred_check_branch
      %14 = sbr.rel (0) target = $region5
    $region4: #{tpu_custom_call.1} parent=1 // pred_region
      _
    $region5: #{tpu_custom_call.1} parent=1 // pred_fallthru
      _
    // Predicated region
    $region6: #{tpu_custom_call.1} parent=1 // pred_check
      _
    $region7: #{tpu_custom_call.1} parent=1 // pred_check_branch
      %16 = sbr.rel (0) target = $region9
    $region8: #{tpu_custom_call.1} parent=1 // pred_region
      _
    $region9: #{tpu_custom_call.1} parent=1 // pred_fallthru
      _
    // Predicated region
    $region10: #{tpu_custom_call.1} parent=1 // pred_check
      _
    $region11: #{tpu_custom_call.1} parent=1 // pred_check_branch
      %18 = sbr.rel (0) target = $region13
    $region12: #{tpu_custom_call.1} parent=1 // pred_region
      _
    $region13: #{tpu_custom_call.1} parent=1 // pred_fallthru
      _
    // Predicated region
    $region14: #{tpu_custom_call.1} parent=1 // pred_check
      _
    $region15: #{tpu_custom_call.1} parent=1 // pred_check_branch
      %20 = sbr.rel (0) target = $region17
    $region16: #{tpu_custom_call.1} parent=1 // pred_region
      _
    $region17: #{tpu_custom_call.1} parent=1 // pred_fallthru
      _
    // Predicated region
    $region18: #{tpu_custom_call.1} parent=1 // pred_check
      _
    $region19: #{tpu_custom_call.1} parent=1 // pred_check_branch
      %22 = sbr.rel (0) target = $region21
    $region20: #{tpu_custom_call.1} parent=1 // pred_region
      _
    $region21: #{tpu_custom_call.1} parent=1 // pred_fallthru
      _
    // Predicated region
    $region22: #{tpu_custom_call.1} parent=1 // pred_check
      _
    $region23: #{tpu_custom_call.1} parent=1 // pred_check_branch
      %24 = sbr.rel (0) target = $region25
    $region24: #{tpu_custom_call.1} parent=1 // pred_region
      _
    $region25: #{tpu_custom_call.1} parent=1 // pred_fallthru
      _
    // Predicated region
    $region26: #{tpu_custom_call.1} parent=1 // pred_check
      _
    $region27: #{tpu_custom_call.1} parent=1 // pred_check_branch
      %26 = sbr.rel (0) target = $region29
    $region28: #{tpu_custom_call.1} parent=1 // pred_region
      _
    $region29: #{tpu_custom_call.1} parent=1 // pred_fallthru
      _
    %v27 = vld [vmem:[%s0] sm:$0x3]
    %v28 = vld [vmem:[%s1] sm:$0xff]
    %v29 = vld [vmem:[%s2] sm:$0x1]
    %v31 = vlaneseq
    %v32 = vshrl.u32 %v31, 7
    %v33 = vsub.s32 0, %v32
    %v34 = vrot.slane %v29, %v33
    %vm36 = vcmask 64512
    %v38 = vsel %vm36, %v27, 0
    %40 = vmatprep.subr.mxu0 0.0
    %41 = vmatpush1.msra.mxu0 %v28
    %42 = vmatprep.subr.mxu0 0.0
    %43 = vmatpush1.msra.mxu0 0.0
    %44 = vmatprep.subr.mxu0 0.0
    %45 = vmatpush1.msra.mxu0 0.0
    %46 = vmatprep.subr.mxu0 0.0
    %47 = vmatpush1.msra.mxu0 0.0
    %48 = vmatprep.subr.mxu0 0.0
    %49 = vmatpush1.msra.mxu0 0.0
    %50 = vmatprep.subr.mxu0 0.0
    %51 = vmatpush1.msra.mxu0 0.0
    %52 = vmatprep.subr.mxu0 0.0
    %53 = vmatpush1.msra.mxu0 0.0
    %54 = vmatprep.subr.mxu0 0.0
    %55 = vmatpush1.msra.mxu0 0.0
    %56 = vmatprep.subr.mxu0 0.0
    %57 = vmatpush1.msra.mxu0 0.0
    %58 = vmatprep.subr.mxu0 0.0
    %59 = vmatpush1.msra.mxu0 0.0
    %60 = vmatprep.subr.mxu0 0.0
    %61 = vmatpush1.msra.mxu0 0.0
    %62 = vmatprep.subr.mxu0 0.0
    %63 = vmatpush1.msra.mxu0 0.0
    %64 = vmatprep.subr.mxu0 0.0
    %65 = vmatpush1.msra.mxu0 0.0
    %66 = vmatprep.subr.mxu0 0.0
    %67 = vmatpush1.msra.mxu0 0.0
    %68 = vmatprep.subr.mxu0 0.0
    %69 = vmatpush1.msra.mxu0 0.0
    %70 = vmatprep.subr.mxu0 0.0
    %71 = vmatpush1.msra.mxu0 0.0
    %72 = vmatprep.subr.mxu0 0.0
    %73 = vmatpush1.msra.mxu0 0.0
    %74 = vmatprep.subr.mxu0 0.0
    %75 = vmatpush1.msra.mxu0 0.0
    %76 = vmatprep.subr.mxu0 0.0
    %77 = vmatpush1.msra.mxu0 0.0
    %78 = vmatprep.subr.mxu0 0.0
    %79 = vmatpush1.msra.mxu0 0.0
    %80 = vmatprep.subr.mxu0 0.0
    %81 = vmatpush1.msra.mxu0 0.0
    %82 = vmatprep.subr.mxu0 0.0
    %83 = vmatpush1.msra.mxu0 0.0
    %84 = vmatprep.subr.mxu0 0.0
    %85 = vmatpush1.msra.mxu0 0.0
    %86 = vmatprep.subr.mxu0 0.0
    %87 = vmatpush1.msra.mxu0 0.0
    %88 = vmatprep.subr.mxu0 0.0
    %89 = vmatpush1.msra.mxu0 0.0
    %90 = vmatprep.subr.mxu0 0.0
    %91 = vmatpush1.msra.mxu0 0.0
    %92 = vmatprep.subr.mxu0 0.0
    %93 = vmatpush1.msra.mxu0 0.0
    %94 = vmatprep.subr.mxu0 0.0
    %95 = vmatpush1.msra.mxu0 0.0
    %96 = vmatprep.subr.mxu0 0.0
    %97 = vmatpush1.msra.mxu0 0.0
    %98 = vmatprep.subr.mxu0 0.0
    %99 = vmatpush1.msra.mxu0 0.0
    %100 = vmatprep.subr.mxu0 0.0
    %101 = vmatpush1.msra.mxu0 0.0
    %102 = vmatprep.subr.mxu0 0.0
    %103 = vmatpush1.msra.mxu0 0.0
    %104 = vmatprep.mubr.f32.mxu0 0.0
    %105 = vmatmul.mubr.f32.gmra.mrb[0].mxu0 %v38
    %v106 = vpop.f32.mrb[0].mxu0
    %v107 = vadd.f32 %v34, %v106
    %v108 = vpop.f32.mrb[0].mxu0
    %109 = vdwg.mxu0
    %v110 = vmax.f32 %v107, 0.0
    %v111 = vld [vmem:[%s3] sm:$0xff]
    %v112 = vld [vmem:[%s4] sm:$0x1]
    %v114 = vlaneseq
    %v115 = vshrl.u32 %v114, 7
    %v116 = vsub.s32 0, %v115
    %v117 = vrot.slane %v112, %v116
    %v120 = vsel %vm36, %v110, 0
    %122 = vmatprep.subr.mxu0 0.0
    %123 = vmatpush1.msra.mxu0 %v111
    %124 = vmatprep.subr.mxu0 0.0
    %125 = vmatpush1.msra.mxu0 0.0
    %126 = vmatprep.subr.mxu0 0.0
    %127 = vmatpush1.msra.mxu0 0.0
    %128 = vmatprep.subr.mxu0 0.0
    %129 = vmatpush1.msra.mxu0 0.0
    %130 = vmatprep.subr.mxu0 0.0
    %131 = vmatpush1.msra.mxu0 0.0
    %132 = vmatprep.subr.mxu0 0.0
    %133 = vmatpush1.msra.mxu0 0.0
    %134 = vmatprep.subr.mxu0 0.0
    %135 = vmatpush1.msra.mxu0 0.0
    %136 = vmatprep.subr.mxu0 0.0
    %137 = vmatpush1.msra.mxu0 0.0
    %138 = vmatprep.subr.mxu0 0.0
    %139 = vmatpush1.msra.mxu0 0.0
    %140 = vmatprep.subr.mxu0 0.0
    %141 = vmatpush1.msra.mxu0 0.0
    %142 = vmatprep.subr.mxu0 0.0
    %143 = vmatpush1.msra.mxu0 0.0
    %144 = vmatprep.subr.mxu0 0.0
    %145 = vmatpush1.msra.mxu0 0.0
    %146 = vmatprep.subr.mxu0 0.0
    %147 = vmatpush1.msra.mxu0 0.0
    %148 = vmatprep.subr.mxu0 0.0
    %149 = vmatpush1.msra.mxu0 0.0
    %150 = vmatprep.subr.mxu0 0.0
    %151 = vmatpush1.msra.mxu0 0.0
    %152 = vmatprep.subr.mxu0 0.0
    %153 = vmatpush1.msra.mxu0 0.0
    %154 = vmatprep.subr.mxu0 0.0
    %155 = vmatpush1.msra.mxu0 0.0
    %156 = vmatprep.subr.mxu0 0.0
    %157 = vmatpush1.msra.mxu0 0.0
    %158 = vmatprep.subr.mxu0 0.0
    %159 = vmatpush1.msra.mxu0 0.0
    %160 = vmatprep.subr.mxu0 0.0
    %161 = vmatpush1.msra.mxu0 0.0
    %162 = vmatprep.subr.mxu0 0.0
    %163 = vmatpush1.msra.mxu0 0.0
    %164 = vmatprep.subr.mxu0 0.0
    %165 = vmatpush1.msra.mxu0 0.0
    %166 = vmatprep.subr.mxu0 0.0
    %167 = vmatpush1.msra.mxu0 0.0
    %168 = vmatprep.subr.mxu0 0.0
    %169 = vmatpush1.msra.mxu0 0.0
    %170 = vmatprep.subr.mxu0 0.0
    %171 = vmatpush1.msra.mxu0 0.0
    %172 = vmatprep.subr.mxu0 0.0
    %173 = vmatpush1.msra.mxu0 0.0
    %174 = vmatprep.subr.mxu0 0.0
    %175 = vmatpush1.msra.mxu0 0.0
    %176 = vmatprep.subr.mxu0 0.0
    %177 = vmatpush1.msra.mxu0 0.0
    %178 = vmatprep.subr.mxu0 0.0
    %179 = vmatpush1.msra.mxu0 0.0
    %180 = vmatprep.subr.mxu0 0.0
    %181 = vmatpush1.msra.mxu0 0.0
    %182 = vmatprep.subr.mxu0 0.0
    %183 = vmatpush1.msra.mxu0 0.0
    %184 = vmatprep.subr.mxu0 0.0
    %185 = vmatpush1.msra.mxu0 0.0
    %186 = vmatprep.mubr.f32.mxu0 0.0
    %187 = vmatmul.mubr.f32.gmra.mrb[0].mxu0 %v120
    %v188 = vpop.f32.mrb[0].mxu0
    %v189 = vadd.f32 %v117, %v188
    %v190 = vpop.f32.mrb[0].mxu0
    %191 = vdwg.mxu0
    %v192 = vxor.u32 %v189, 2147483648
    %v193 = vmul.f32 %v192, 1.442695
    %v194 = vpow.pop %v193
    %v195 = vadd.f32 %v194, 1.0
    %v196 = vrcp.pop %v195
    %v197 = vmul.f32 1.0, %v196
    %v198 = vld [vmem:[%s5] sm:$0xff]
    %v199 = vld [vmem:[%s6] sm:$0x1]
    %v201 = vlaneseq
    %v202 = vshrl.u32 %v201, 7
    %v203 = vsub.s32 0, %v202
    %v204 = vrot.slane %v199, %v203
    %206 = vmatprep.subr.mxu0 0.0
    %207 = vmatpush1.msra.mxu0 %v198
    %208 = vmatprep.subr.mxu0 0.0
    %209 = vmatpush1.msra.mxu0 0.0
    %210 = vmatprep.subr.mxu0 0.0
    %211 = vmatpush1.msra.mxu0 0.0
    %212 = vmatprep.subr.mxu0 0.0
    %213 = vmatpush1.msra.mxu0 0.0
    %214 = vmatprep.subr.mxu0 0.0
    %215 = vmatpush1.msra.mxu0 0.0
    %216 = vmatprep.subr.mxu0 0.0
    %217 = vmatpush1.msra.mxu0 0.0
    %218 = vmatprep.subr.mxu0 0.0
    %219 = vmatpush1.msra.mxu0 0.0
    %220 = vmatprep.subr.mxu0 0.0
    %221 = vmatpush1.msra.mxu0 0.0
    %222 = vmatprep.subr.mxu0 0.0
    %223 = vmatpush1.msra.mxu0 0.0
    %224 = vmatprep.subr.mxu0 0.0
    %225 = vmatpush1.msra.mxu0 0.0
    %226 = vmatprep.subr.mxu0 0.0
    %227 = vmatpush1.msra.mxu0 0.0
    %228 = vmatprep.subr.mxu0 0.0
    %229 = vmatpush1.msra.mxu0 0.0
    %230 = vmatprep.subr.mxu0 0.0
    %231 = vmatpush1.msra.mxu0 0.0
    %232 = vmatprep.subr.mxu0 0.0
    %233 = vmatpush1.msra.mxu0 0.0
    %234 = vmatprep.subr.mxu0 0.0
    %235 = vmatpush1.msra.mxu0 0.0
    %236 = vmatprep.subr.mxu0 0.0
    %237 = vmatpush1.msra.mxu0 0.0
    %238 = vmatprep.subr.mxu0 0.0
    %239 = vmatpush1.msra.mxu0 0.0
    %240 = vmatprep.subr.mxu0 0.0
    %241 = vmatpush1.msra.mxu0 0.0
    %242 = vmatprep.subr.mxu0 0.0
    %243 = vmatpush1.msra.mxu0 0.0
    %244 = vmatprep.subr.mxu0 0.0
    %245 = vmatpush1.msra.mxu0 0.0
    %246 = vmatprep.subr.mxu0 0.0
    %247 = vmatpush1.msra.mxu0 0.0
    %248 = vmatprep.subr.mxu0 0.0
    %249 = vmatpush1.msra.mxu0 0.0
    %250 = vmatprep.subr.mxu0 0.0
    %251 = vmatpush1.msra.mxu0 0.0
    %252 = vmatprep.subr.mxu0 0.0
    %253 = vmatpush1.msra.mxu0 0.0
    %254 = vmatprep.subr.mxu0 0.0
    %255 = vmatpush1.msra.mxu0 0.0
    %256 = vmatprep.subr.mxu0 0.0
    %257 = vmatpush1.msra.mxu0 0.0
    %258 = vmatprep.subr.mxu0 0.0
    %259 = vmatpush1.msra.mxu0 0.0
    %260 = vmatprep.subr.mxu0 0.0
    %261 = vmatpush1.msra.mxu0 0.0
    %262 = vmatprep.subr.mxu0 0.0
    %263 = vmatpush1.msra.mxu0 0.0
    %264 = vmatprep.subr.mxu0 0.0
    %265 = vmatpush1.msra.mxu0 0.0
    %266 = vmatprep.subr.mxu0 0.0
    %267 = vmatpush1.msra.mxu0 0.0
    %268 = vmatprep.subr.mxu0 0.0
    %269 = vmatpush1.msra.mxu0 0.0
    %270 = vmatprep.mubr.f32.mxu0 0.0
    %271 = vmatmul.mubr.f32.gmra.mrb[0].mxu0 %v120
    %v272 = vpop.f32.mrb[0].mxu0
    %v273 = vadd.f32 %v204, %v272
    %v274 = vpop.f32.mrb[0].mxu0
    %275 = vdwg.mxu0
    %v276 = vxor.u32 %v273, 2147483648
    %v277 = vmul.f32 %v276, 1.442695
    %v278 = vpow.pop %v277
    %v279 = vadd.f32 %v278, 1.0
    %v280 = vrcp.pop %v279
    %v281 = vmul.f32 1.0, %v280
    %v282 = vmul.f32 %v197, %v281
    %vm283 = vcmask 25600
    %284 = vst.msk [vmem:[#allocation2] sm:$0x3] %vm283, %v282
    // Predicated region
    $region30: #{tpu_custom_call.1} parent=1 // pred_check
      _
    $region31: #{tpu_custom_call.1} parent=1 // pred_check_branch
      %286 = sbr.rel (0) target = $region33
    $region32: #{tpu_custom_call.1} parent=1 // pred_region
      %s288 = ssub.s32 32, 32
      %289 = vsyncadd [#allocation3], %s288
      %s291 = sshll.u32 [#allocation2], 4
      %s292 = int_to_ptr.vmem [resolvable:$true] %s291
      %294 = dma.vmem_to_hbm [thread:$0]  %s292, 32, %s7, [#allocation3]
    $region33: #{tpu_custom_call.1} parent=1 // pred_fallthru
      _
    // Predicated region
    $region34: #{tpu_custom_call.1} parent=1 // pred_check
      _
    $region35: #{tpu_custom_call.1} parent=1 // pred_check_branch
      %296 = sbr.rel (0) target = $region37
    $region36: #{tpu_custom_call.1} parent=1 // pred_region
      %297 = dma.done [#allocation3], 32
    $region37: #{tpu_custom_call.1} parent=1 // pred_fallthru
      _
    %298 = vsyncpa [#allocation3], 1

</llo_original>
